<compile_context>
chip_gen: v5e
topology: v5e:2x2
jax: 0.10.0
libtpu: 0.0.40
codegen_flags: <defaults>
</compile_context>

<pallas_src>
import functools

import jax
import jax.numpy as jnp
import numpy as np
from jax import lax
from jax.experimental import pallas as pl
from jax.experimental.pallas import tpu as pltpu


def attention_kernel(x_ref, wp_ref, bp_ref, bscore_ref, wfc_ref, bfc_ref, o_ref,
                     *, num_heads, eps):
    """One batch tile of AttentionModule.forward (eval mode).

    Fused projection columns = [ Q (scale folded, tiled H times)
                               | K rolled by r*D for r = 0..H-1
                               | V rolled by r*D for r = 0..H-1 ].
    With K_r[b,c] = K[b,(c + r*D) % C]:
        S[:, r*C:(r+1)*C] = (Q * K_r) @ blockmask
        S[b, r*C + h*D + d] = scale * <Q[b,h,:], K[b,(h+r)%H,:]> = scores[b, h, (h+r)%H]
    so the softmax over key heads j becomes an elementwise softmax over the H
    C-column blocks of S, and attn = sum_r softmax_r * V_r.  Every reduction rides
    on the MXU; the only cross-lane reductions are the two LayerNorm means.
    """
    H = num_heads
    mm_dtype = wp_ref.dtype                        # bf16 (default) or f32 matmul operands
    x = x_ref[...].astype(jnp.float32)             # (TB, C)
    C = x.shape[-1]
    HC = H * C

    # ---- LayerNorm statistics (affine is folded into wp/bp by the wrapper) ----
    mu = jnp.mean(x, axis=-1, keepdims=True)
    xc = x - mu
    var = jnp.mean(xc * xc, axis=-1, keepdims=True)
    xhat = xc * lax.rsqrt(var + eps)                                   # EUP rsqrt

    # ---- single fused projection on the MXU: (TB, C) @ (C, 3*H*C), f32 accumulation ----
    proj = jnp.dot(xhat.astype(mm_dtype), wp_ref[...],
                   preferred_element_type=jnp.float32) + bp_ref[...]

    # ---- all head-alignment scores in ONE lane-dense matmul ----
    e_in = proj[:, :HC] * proj[:, HC:2 * HC]                           # f32 VPU (v5e-safe)
    s = jnp.dot(e_in.astype(mm_dtype), bscore_ref[...],
                preferred_element_type=jnp.float32)                    # (TB, H*C)

    # ---- softmax over the H alignment blocks (== softmax over key heads) ----
    s_r = [s[:, r * C:(r + 1) * C] for r in range(H)]
    m = s_r[0]
    for r in range(1, H):
        m = jnp.maximum(m, s_r[r])
    e = [jnp.exp(sr - m) for sr in s_r]                                # EUP exp
    denom = e[0]
    for r in range(1, H):
        denom = denom + e[r]
    inv = pl.reciprocal(denom, approx=True)                            # EUP approx recip
    inv = inv * (2.0 - denom * inv)                                    # 1 Newton step (denom in [1,H])

    # ---- attn = sum_r w_r * V_r  (V_r columns live in the same fused projection) ----
    voff = 2 * HC
    acc = (e[0] * inv) * proj[:, voff:voff + C]
    for r in range(1, H):
        acc = acc + (e[r] * inv) * proj[:, voff + r * C:voff + (r + 1) * C]

    # ---- output projection (MXU) ----
    out = jnp.dot(acc.astype(mm_dtype), wfc_ref[...],
                  preferred_element_type=jnp.float32) + bfc_ref[...]
    # TODO(synk): nn.Dropout(0.1) is identity in eval mode; training-time mask not implemented.
    o_ref[...] = out.astype(o_ref.dtype)


def _round_up(n, m):
    return (n + m - 1) // m * m


def _pick_batch_tile(b_pad8):
    """One grid step for small batches; otherwise a small EVEN number of steps
    (so v7x's two TensorCores both get work via the 'parallel' grid axis), capped
    at 2048 rows/tile to amortize per-step overhead and MXU fill/drain."""
    if b_pad8 <= 256:
        return b_pad8
    n_steps = max(2, pl.cdiv(b_pad8, 2048))
    n_steps += n_steps % 2                       # even step count -> splits across 2 TCs
    return _round_up(pl.cdiv(b_pad8, n_steps), 8)


def attention_forward(x, params, *, num_heads, matmul_dtype=jnp.bfloat16):
    """AttentionModule.forward (eval mode) as a single fused Pallas TPU kernel.

    matmul_dtype=jnp.bfloat16 (default) runs the MXU at native bf16 rate (agreement with
    the f32 reference ~1e-2 abs at these magnitudes); matmul_dtype=jnp.float32 keeps the
    <=1e-4-accurate path.  Elementwise math is always f32.
    """
    B, C = x.shape
    H = num_heads
    assert C % H == 0, "in_channels must be divisible by num_heads"
    D = C // H
    out_ch = params["w_fc"].shape[0]
    scale = float(D) ** (-0.5)
    eps = 1e-5
    f32 = jnp.float32

    # ---------- wrapper-side weight preparation (pure JAX, traced once under jit) ----------
    w_qkv_t = params["w_qkv"].astype(f32).T                  # (C, 3C), columns = [Q | K | V]
    b_qkv = params["b_qkv"].astype(f32)
    # Fold the attention scale into Q so the score matrix below is exact 0/1 (bf16-safe).
    wq, wk, wv = scale * w_qkv_t[:, :C], w_qkv_t[:, C:2 * C], w_qkv_t[:, 2 * C:]
    bq, bk, bv = scale * b_qkv[:C], b_qkv[C:2 * C], b_qkv[2 * C:]

    # Fused projection columns: [ Q tiled x H | K_0..K_{H-1} | V_0..V_{H-1} ] where
    # xn @ roll(Wk, -r*D, axis=1) == roll(K, -r*D, axis=1).  Tiling Q keeps the score
    # stage lane-dense: one (TB, H*C) elementwise mul + one (TB,H*C)@(H*C,H*C) matmul.
    w_blocks = [wq] * H \
        + [jnp.roll(wk, -r * D, axis=1) for r in range(H)] \
        + [jnp.roll(wv, -r * D, axis=1) for r in range(H)]
    b_blocks = [bq] * H \
        + [jnp.roll(bk, -r * D) for r in range(H)] \
        + [jnp.roll(bv, -r * D) for r in range(H)]
    w_proj = jnp.concatenate(w_blocks, axis=1)               # (C, 3*H*C)
    b_proj = jnp.concatenate(b_blocks, axis=0)               # (3*H*C,)

    # Fold the LayerNorm affine: xn @ W + b == xhat @ (gamma[:,None]*W) + (beta @ W + b)
    gamma = params["ln_gamma"].astype(f32)
    beta = params["ln_beta"].astype(f32)
    w_proj_eff = (gamma[:, None] * w_proj).astype(matmul_dtype)
    b_proj_eff = (beta @ w_proj + b_proj).reshape(1, -1)     # bias stays f32

    # Block-diagonal head-sum/broadcast matrix for the fused score matmul:
    #   b_score[r*C + c, r'*C + c'] = 1 if (r == r' and c//D == c'//D) else 0
    blockmask = jnp.repeat(jnp.repeat(jnp.eye(H, dtype=f32), D, axis=0), D, axis=1)
    b_score = jnp.kron(jnp.eye(H, dtype=f32), blockmask).astype(matmul_dtype)   # (HC, HC)

    w_fc = params["w_fc"].astype(f32).T.astype(matmul_dtype)  # (C, out_ch)
    b_fc = params["b_fc"].astype(f32).reshape(1, out_ch)      # bias stays f32

    # ---------- batch tiling ----------
    # Explicit zero-pad + slice kept for ragged B (partial-trailing-block masking is
    # version-dependent; correctness first).  Padded rows are all-zero -> LayerNorm
    # gives xhat = 0 (no NaN/Inf) and every row is independent, so they can't
    # contaminate valid rows.
    B_pad8 = _round_up(max(B, 8), 8)
    TB = _pick_batch_tile(B_pad8)
    B_pad = _round_up(B_pad8, TB)
    x_in = x if B_pad == B else jnp.pad(x, ((0, B_pad - B), (0, 0)))

    HC = H * C
    PW = 3 * HC
    kernel = functools.partial(attention_kernel, num_heads=H, eps=eps)

    out = pl.pallas_call(
        kernel,
        out_shape=jax.ShapeDtypeStruct((B_pad, out_ch), x.dtype),
        grid_spec=pltpu.PrefetchScalarGridSpec(
            num_scalar_prefetch=0,
            grid=(B_pad // TB,),
            in_specs=[
                pl.BlockSpec((TB, C), lambda i: (i, 0)),         # x tile
                pl.BlockSpec((C, PW), lambda i: (0, 0)),         # fused projection weights
                pl.BlockSpec((1, PW), lambda i: (0, 0)),         # fused projection bias (f32)
                pl.BlockSpec((HC, HC), lambda i: (0, 0)),        # score block-sum matrix
                pl.BlockSpec((C, out_ch), lambda i: (0, 0)),     # W_fc
                pl.BlockSpec((1, out_ch), lambda i: (0, 0)),     # b_fc (f32)
            ],
            out_specs=pl.BlockSpec((TB, out_ch), lambda i: (i, 0)),
        ),
        compiler_params=pltpu.CompilerParams(
            dimension_semantics=("parallel",)),
    )(x_in, w_proj_eff, b_proj_eff, b_score, w_fc, b_fc)
    return out[:B]


def reference_forward(x, params, *, num_heads):
    """Pure-JAX transcription of the PyTorch AttentionModule.forward (eval mode)."""
    with jax.default_matmul_precision("float32"):
        B, C = x.shape
        head_dim = C // num_heads
        mu = jnp.mean(x, axis=-1, keepdims=True)
        var = jnp.mean((x - mu) ** 2, axis=-1, keepdims=True)
        xn = (x - mu) / jnp.sqrt(var + 1e-5) * params["ln_gamma"] + params["ln_beta"]
        qkv = xn @ params["w_qkv"].T + params["b_qkv"]
        qkv = qkv.reshape(B, 3, num_heads, head_dim).transpose(1, 0, 2, 3)
        Q, K, V = qkv[0], qkv[1], qkv[2]
        scores = jnp.einsum('bhd,bjd->bhj', Q, K) * (head_dim ** -0.5)
        w = jax.nn.softmax(scores, axis=-1)
        attn = jnp.einsum('bhj,bjd->bhd', w, V).reshape(B, C)
        return attn @ params["w_fc"].T + params["b_fc"]


if __name__ == "__main__":
    B = 16
    in_channels = 32
    out_channels = 32
    num_heads = 4

    key = jax.random.PRNGKey(0)
    kx, k1, k2, k3, k4, k5, k6 = jax.random.split(key, 7)

    x = jax.random.normal(kx, (B, in_channels), dtype=jnp.float32)

    # Deterministic synthetic parameters (shapes follow the PyTorch __init__);
    # non-trivial gamma/beta exercise the LayerNorm-affine folding path.
    params = {
        "ln_gamma": 1.0 + 0.1 * jax.random.normal(k5, (in_channels,), jnp.float32),
        "ln_beta": 0.1 * jax.random.normal(k6, (in_channels,), jnp.float32),
        "w_qkv": 0.1 * jax.random.normal(k1, (3 * in_channels, in_channels), jnp.float32),
        "b_qkv": 0.1 * jax.random.normal(k2, (3 * in_channels,), jnp.float32),
        "w_fc": 0.1 * jax.random.normal(k3, (out_channels, in_channels), jnp.float32),
        "b_fc": 0.1 * jax.random.normal(k4, (out_channels,), jnp.float32),
    }

    # 1) f32 matmul-operand path: tight agreement with the PyTorch module.
    fwd_f32 = jax.jit(functools.partial(attention_forward, num_heads=num_heads,
                                        matmul_dtype=jnp.float32))
    out = jax.block_until_ready(fwd_f32(x, params))
    ref = reference_forward(x, params, num_heads=num_heads)
    np.testing.assert_allclose(np.asarray(out), np.asarray(ref), rtol=1e-4, atol=1e-4)

    # 2) Default bf16 matmul-operand path (MXU-native on v5e/v6e/v7x): looser tolerance.
    fwd_bf16 = jax.jit(functools.partial(attention_forward, num_heads=num_heads))
    out_bf = jax.block_until_ready(fwd_bf16(x, params))
    np.testing.assert_allclose(np.asarray(out_bf), np.asarray(ref), rtol=2e-2, atol=3e-2)

    # 3) Ragged batch (not a multiple of the 8-row sublane tile): zero-pad + slice path.
    x13 = x[:13]
    out13 = jax.block_until_ready(fwd_f32(x13, params))
    ref13 = reference_forward(x13, params, num_heads=num_heads)
    np.testing.assert_allclose(np.asarray(out13), np.asarray(ref13), rtol=1e-4, atol=1e-4)

    # 4) Multi-tile path: grid=(2,) with "parallel" semantics (both v7x TensorCores).
    x512 = jax.random.normal(jax.random.PRNGKey(1), (512, in_channels), jnp.float32)
    out512 = jax.block_until_ready(fwd_bf16(x512, params))
    ref512 = reference_forward(x512, params, num_heads=num_heads)
    np.testing.assert_allclose(np.asarray(out512), np.asarray(ref512), rtol=2e-2, atol=3e-2)

    # 5) num_heads=1 — the configuration LNAct actually instantiates inside SkipNet.
    fwd_h1 = jax.jit(functools.partial(attention_forward, num_heads=1,
                                       matmul_dtype=jnp.float32))
    out_h1 = jax.block_until_ready(fwd_h1(x, params))
    ref_h1 = reference_forward(x, params, num_heads=1)
    np.testing.assert_allclose(np.asarray(out_h1), np.asarray(ref_h1), rtol=1e-4, atol=1e-4)

    print("KERNEL_OK")
</pallas_src>

<mosaic_0001>
module attributes {stable_mosaic.version = 11 : i64} {
  func.func @attention_kernel(%arg0: i32, %arg1: memref<16x32xf32, #tpu.memory_space<vmem>>, %arg2: memref<32x384xf32, #tpu.memory_space<vmem>>, %arg3: memref<1x384xf32, #tpu.memory_space<vmem>>, %arg4: memref<128x128xf32, #tpu.memory_space<vmem>>, %arg5: memref<32x32xf32, #tpu.memory_space<vmem>>, %arg6: memref<1x32xf32, #tpu.memory_space<vmem>>, %arg7: memref<16x32xf32, #tpu.memory_space<vmem>>) attributes {dimension_semantics = [#tpu.dimension_semantics<parallel>], iteration_bounds = array<i64: 1>, scalar_prefetch = 0 : i64, scratch_operands = 0 : i64, tpu.core_type = #tpu.core_type<tc>, window_params = [{transform_indices = @transform_0, window_bounds = array<i64: 16, 32>}, {pipeline_mode = #tpu.pipeline_mode<synchronous>, transform_indices = @transform_1, window_bounds = array<i64: 32, 384>}, {pipeline_mode = #tpu.pipeline_mode<synchronous>, transform_indices = @transform_2, window_bounds = array<i64: 1, 384>}, {pipeline_mode = #tpu.pipeline_mode<synchronous>, transform_indices = @transform_3, window_bounds = array<i64: 128, 128>}, {pipeline_mode = #tpu.pipeline_mode<synchronous>, transform_indices = @transform_4, window_bounds = array<i64: 32, 32>}, {pipeline_mode = #tpu.pipeline_mode<synchronous>, transform_indices = @transform_5, window_bounds = array<i64: 1, 32>}, {transform_indices = @transform_6, window_bounds = array<i64: 16, 32>}]} {
    %c0 = arith.constant 0 : index
    %c0_0 = arith.constant 0 : index
    %0 = vector.load %arg1[%c0, %c0_0] : memref<16x32xf32, #tpu.memory_space<vmem>>, vector<16x32xf32>
    %cst = arith.constant dense<0.000000e+00> : vector<16xf32>
    %1 = vector.multi_reduction <add>, %0, %cst [1] : vector<16x32xf32> to vector<16xf32>
    %2 = vector.shape_cast %1 : vector<16xf32> to vector<16x1xf32>
    %cst_1 = arith.constant 3.200000e+01 : f32
    %3 = vector.broadcast %cst_1 : f32 to vector<16x1xf32>
    %4 = arith.divf %2, %3 : vector<16x1xf32>
    %5 = vector.broadcast %4 : vector<16x1xf32> to vector<16x32xf32>
    %6 = arith.subf %0, %5 : vector<16x32xf32>
    %7 = arith.mulf %6, %6 : vector<16x32xf32>
    %cst_2 = arith.constant dense<0.000000e+00> : vector<16xf32>
    %8 = vector.multi_reduction <add>, %7, %cst_2 [1] : vector<16x32xf32> to vector<16xf32>
    %9 = vector.shape_cast %8 : vector<16xf32> to vector<16x1xf32>
    %cst_3 = arith.constant 3.200000e+01 : f32
    %10 = vector.broadcast %cst_3 : f32 to vector<16x1xf32>
    %11 = arith.divf %9, %10 : vector<16x1xf32>
    %cst_4 = arith.constant 9.99999974E-6 : f32
    %12 = vector.broadcast %cst_4 : f32 to vector<16x1xf32>
    %13 = arith.addf %11, %12 : vector<16x1xf32>
    %14 = math.rsqrt %13 : vector<16x1xf32>
    %15 = vector.broadcast %14 : vector<16x1xf32> to vector<16x32xf32>
    %16 = arith.mulf %6, %15 : vector<16x32xf32>
    %c0_5 = arith.constant 0 : index
    %c0_6 = arith.constant 0 : index
    %17 = vector.load %arg2[%c0_5, %c0_6] : memref<32x384xf32, #tpu.memory_space<vmem>>, vector<32x384xf32>
    %cst_7 = arith.constant dense<0.000000e+00> : vector<16x384xf32>
    %18 = tpu.matmul %16, %17, %cst_7 {dimension_numbers = #tpu.dot_dimension_numbers<[1], [0], [0], [1], [0, 0, 1, 1], [], []>} : vector<16x32xf32>, vector<32x384xf32>, vector<16x384xf32> -> vector<16x384xf32>
    %c0_8 = arith.constant 0 : index
    %c0_9 = arith.constant 0 : index
    %19 = vector.load %arg3[%c0_8, %c0_9] : memref<1x384xf32, #tpu.memory_space<vmem>>, vector<1x384xf32>
    %20 = vector.broadcast %19 : vector<1x384xf32> to vector<16x384xf32>
    %21 = arith.addf %18, %20 : vector<16x384xf32>
    %22 = vector.extract_strided_slice %21 {offsets = [0, 0], sizes = [16, 128], strides = [1, 1]} : vector<16x384xf32> to vector<16x128xf32>
    %23 = vector.extract_strided_slice %21 {offsets = [0, 128], sizes = [16, 128], strides = [1, 1]} : vector<16x384xf32> to vector<16x128xf32>
    %24 = arith.mulf %22, %23 : vector<16x128xf32>
    %c0_10 = arith.constant 0 : index
    %c0_11 = arith.constant 0 : index
    %25 = vector.load %arg4[%c0_10, %c0_11] : memref<128x128xf32, #tpu.memory_space<vmem>>, vector<128x128xf32>
    %cst_12 = arith.constant dense<0.000000e+00> : vector<16x128xf32>
    %26 = tpu.matmul %24, %25, %cst_12 {dimension_numbers = #tpu.dot_dimension_numbers<[1], [0], [0], [1], [0, 0, 1, 1], [], []>} : vector<16x128xf32>, vector<128x128xf32>, vector<16x128xf32> -> vector<16x128xf32>
    %27 = vector.extract_strided_slice %26 {offsets = [0, 0], sizes = [16, 32], strides = [1, 1]} : vector<16x128xf32> to vector<16x32xf32>
    %28 = vector.extract_strided_slice %26 {offsets = [0, 32], sizes = [16, 32], strides = [1, 1]} : vector<16x128xf32> to vector<16x32xf32>
    %29 = vector.extract_strided_slice %26 {offsets = [0, 64], sizes = [16, 32], strides = [1, 1]} : vector<16x128xf32> to vector<16x32xf32>
    %30 = vector.extract_strided_slice %26 {offsets = [0, 96], sizes = [16, 32], strides = [1, 1]} : vector<16x128xf32> to vector<16x32xf32>
    %31 = arith.maximumf %27, %28 : vector<16x32xf32>
    %32 = arith.maximumf %31, %29 : vector<16x32xf32>
    %33 = arith.maximumf %32, %30 : vector<16x32xf32>
    %34 = arith.subf %27, %33 : vector<16x32xf32>
    %35 = math.exp %34 : vector<16x32xf32>
    %36 = arith.subf %28, %33 : vector<16x32xf32>
    %37 = math.exp %36 : vector<16x32xf32>
    %38 = arith.subf %29, %33 : vector<16x32xf32>
    %39 = math.exp %38 : vector<16x32xf32>
    %40 = arith.subf %30, %33 : vector<16x32xf32>
    %41 = math.exp %40 : vector<16x32xf32>
    %42 = arith.addf %35, %37 : vector<16x32xf32>
    %43 = arith.addf %42, %39 : vector<16x32xf32>
    %44 = arith.addf %43, %41 : vector<16x32xf32>
    %45 = tpu.reciprocal %44 {approx = true} : vector<16x32xf32> -> vector<16x32xf32>
    %46 = arith.mulf %44, %45 : vector<16x32xf32>
    %cst_13 = arith.constant 2.000000e+00 : f32
    %47 = vector.broadcast %cst_13 : f32 to vector<16x32xf32>
    %48 = arith.subf %47, %46 : vector<16x32xf32>
    %49 = arith.mulf %45, %48 : vector<16x32xf32>
    %50 = arith.mulf %35, %49 : vector<16x32xf32>
    %51 = vector.extract_strided_slice %21 {offsets = [0, 256], sizes = [16, 32], strides = [1, 1]} : vector<16x384xf32> to vector<16x32xf32>
    %52 = arith.mulf %50, %51 : vector<16x32xf32>
    %53 = arith.mulf %37, %49 : vector<16x32xf32>
    %54 = vector.extract_strided_slice %21 {offsets = [0, 288], sizes = [16, 32], strides = [1, 1]} : vector<16x384xf32> to vector<16x32xf32>
    %55 = arith.mulf %53, %54 : vector<16x32xf32>
    %56 = arith.addf %52, %55 : vector<16x32xf32>
    %57 = arith.mulf %39, %49 : vector<16x32xf32>
    %58 = vector.extract_strided_slice %21 {offsets = [0, 320], sizes = [16, 32], strides = [1, 1]} : vector<16x384xf32> to vector<16x32xf32>
    %59 = arith.mulf %57, %58 : vector<16x32xf32>
    %60 = arith.addf %56, %59 : vector<16x32xf32>
    %61 = arith.mulf %41, %49 : vector<16x32xf32>
    %62 = vector.extract_strided_slice %21 {offsets = [0, 352], sizes = [16, 32], strides = [1, 1]} : vector<16x384xf32> to vector<16x32xf32>
    %63 = arith.mulf %61, %62 : vector<16x32xf32>
    %64 = arith.addf %60, %63 : vector<16x32xf32>
    %c0_14 = arith.constant 0 : index
    %c0_15 = arith.constant 0 : index
    %65 = vector.load %arg5[%c0_14, %c0_15] : memref<32x32xf32, #tpu.memory_space<vmem>>, vector<32x32xf32>
    %cst_16 = arith.constant dense<0.000000e+00> : vector<16x32xf32>
    %66 = tpu.matmul %64, %65, %cst_16 {dimension_numbers = #tpu.dot_dimension_numbers<[1], [0], [0], [1], [0, 0, 1, 1], [], []>} : vector<16x32xf32>, vector<32x32xf32>, vector<16x32xf32> -> vector<16x32xf32>
    %c0_17 = arith.constant 0 : index
    %c0_18 = arith.constant 0 : index
    %67 = vector.load %arg6[%c0_17, %c0_18] : memref<1x32xf32, #tpu.memory_space<vmem>>, vector<1x32xf32>
    %68 = vector.broadcast %67 : vector<1x32xf32> to vector<16x32xf32>
    %69 = arith.addf %66, %68 : vector<16x32xf32>
    %c0_19 = arith.constant 0 : index
    %c0_20 = arith.constant 0 : index
    %70 = vector.load %arg7[%c0_19, %c0_20] : memref<16x32xf32, #tpu.memory_space<vmem>>, vector<16x32xf32>
    tpu.vector_store %arg7[%c0_19, %c0_20], %69 {strides = array<i32>} : memref<16x32xf32, #tpu.memory_space<vmem>>, vector<16x32xf32>,
    return
  }
  func.func @transform_0(%arg0: i32) -> (i32, i32) {
    %c0_i32 = arith.constant 0 : i32
    %c0_i32_0 = arith.constant 0 : i32
    return %arg0, %c0_i32 : i32, i32
  }
  func.func @transform_1(%arg0: i32) -> (i32, i32) {
    %c0_i32 = arith.constant 0 : i32
    %c0_i32_0 = arith.constant 0 : i32
    %c0_i32_1 = arith.constant 0 : i32
    return %c0_i32, %c0_i32_0 : i32, i32
  }
  func.func @transform_2(%arg0: i32) -> (i32, i32) {
    %c0_i32 = arith.constant 0 : i32
    %c0_i32_0 = arith.constant 0 : i32
    %c0_i32_1 = arith.constant 0 : i32
    return %c0_i32, %c0_i32_0 : i32, i32
  }
  func.func @transform_3(%arg0: i32) -> (i32, i32) {
    %c0_i32 = arith.constant 0 : i32
    %c0_i32_0 = arith.constant 0 : i32
    %c0_i32_1 = arith.constant 0 : i32
    return %c0_i32, %c0_i32_0 : i32, i32
  }
  func.func @transform_4(%arg0: i32) -> (i32, i32) {
    %c0_i32 = arith.constant 0 : i32
    %c0_i32_0 = arith.constant 0 : i32
    %c0_i32_1 = arith.constant 0 : i32
    return %c0_i32, %c0_i32_0 : i32, i32
  }
  func.func @transform_5(%arg0: i32) -> (i32, i32) {
    %c0_i32 = arith.constant 0 : i32
    %c0_i32_0 = arith.constant 0 : i32
    %c0_i32_1 = arith.constant 0 : i32
    return %c0_i32, %c0_i32_0 : i32, i32
  }
  func.func @transform_6(%arg0: i32) -> (i32, i32) {
    %c0_i32 = arith.constant 0 : i32
    %c0_i32_0 = arith.constant 0 : i32
    return %arg0, %c0_i32 : i32, i32
  }
}

</mosaic_0001>

<llo_original>
// kernel: attention_forward.1
$region0: #{attention_forward.1}
  #allocation0 [shape = 'u32[]', space=smem, size = 0x4, offset = 0x4, fixed_abs, tag = 'smem constant byte address 0x4 - core index']
  #allocation1 [shape = 'u32[72,128]{1,0:T(1,128)}', space=vmem, size = 0x9000, scoped, tag = 'internal scratch']
  %s0 = inlined_call_operand.vmem [shape: f32[16,32], index: 0, kind: input, shape index: {}]
  %s1 = inlined_call_operand.vmem [shape: f32[32,384], index: 1, kind: input, shape index: {}]
  %s2 = inlined_call_operand.vmem [shape: f32[1,384], index: 2, kind: input, shape index: {}]
  %s3 = inlined_call_operand.vmem [shape: f32[128,128], index: 3, kind: input, shape index: {}]
  %s4 = inlined_call_operand.vmem [shape: f32[32,32], index: 4, kind: input, shape index: {}]
  %s5 = inlined_call_operand.vmem [shape: f32[1,32], index: 5, kind: input, shape index: {}]
  %s6 = inlined_call_operand.hbm [shape: f32[16,32], index: 6, kind: output, shape index: {}]
  %s7 = sld [smem:[#allocation0]]
  $region34: #{attention_forward.1} parent=0
    _
  %s9 = ssub.s32 1, %s7
  %s10 = scalar_select 0, %s9, %s7
  $region1: #{attention_forward.1} parent=0
    #allocation2 [shape = 'u8[8192]{0}', space=vmem, size = 0x2000, scoped, tag = 'output window, operand 0, single buffered']
    #allocation3 [shape = 's32[1]{0}', space=sflag, size = 0x4, scoped, tag = 'scoped memory for attention_forward.1']
    %11 = vsyncpa [#allocation3], 0
    // Predicated region
    $region2: #{attention_forward.1} parent=1 // pred_check
      _
    $region3: #{attention_forward.1} parent=1 // pred_check_branch
      %13 = sbr.rel (0) target = $region5
    $region4: #{attention_forward.1} parent=1 // pred_region
      _
    $region5: #{attention_forward.1} parent=1 // pred_fallthru
      _
    // Predicated region
    $region6: #{attention_forward.1} parent=1 // pred_check
      _
    $region7: #{attention_forward.1} parent=1 // pred_check_branch
      %15 = sbr.rel (0) target = $region9
    $region8: #{attention_forward.1} parent=1 // pred_region
      _
    $region9: #{attention_forward.1} parent=1 // pred_fallthru
      _
    // Predicated region
    $region10: #{attention_forward.1} parent=1 // pred_check
      _
    $region11: #{attention_forward.1} parent=1 // pred_check_branch
      %17 = sbr.rel (0) target = $region13
    $region12: #{attention_forward.1} parent=1 // pred_region
      _
    $region13: #{attention_forward.1} parent=1 // pred_fallthru
      _
    // Predicated region
    $region14: #{attention_forward.1} parent=1 // pred_check
      _
    $region15: #{attention_forward.1} parent=1 // pred_check_branch
      %19 = sbr.rel (0) target = $region17
    $region16: #{attention_forward.1} parent=1 // pred_region
      _
    $region17: #{attention_forward.1} parent=1 // pred_fallthru
      _
    // Predicated region
    $region18: #{attention_forward.1} parent=1 // pred_check
      _
    $region19: #{attention_forward.1} parent=1 // pred_check_branch
      %21 = sbr.rel (0) target = $region21
    $region20: #{attention_forward.1} parent=1 // pred_region
      _
    $region21: #{attention_forward.1} parent=1 // pred_fallthru
      _
    // Predicated region
    $region22: #{attention_forward.1} parent=1 // pred_check
      _
    $region23: #{attention_forward.1} parent=1 // pred_check_branch
      %23 = sbr.rel (0) target = $region25
    $region24: #{attention_forward.1} parent=1 // pred_region
      _
    $region25: #{attention_forward.1} parent=1 // pred_fallthru
      _
    %v24 = vld [vmem:[%s0] sm:$0xff]
    %v25 = vld [vmem:[%s0 + $0x8] sm:$0xff]
    %vm26 = vcmask 261120
    %v27 = vsel %vm26, %v24, 0.0
    %28 = vadd.xlane.f32.xlu0 %v27
    %v29 = vpop.xlane.xlu0 %28
    %v30 = vsel %vm26, %v25, 0.0
    %31 = vadd.xlane.f32.xlu0 %v30
    %v32 = vpop.xlane.xlu0 %31
    %v33 = vrcp.pop 32.0
    %v34 = vmul.f32 32.0, %v33
    %v35 = vsub.f32 1.0, %v34
    %v36 = vmul.f32 %v33, %v35
    %v37 = vadd.f32 %v33, %v36
    %vm38 = vweird.f32 %v33
    %v39 = vsel %vm38, %v33, %v37
    %v40 = vmul.f32 %v29, %v39
    %v41 = vmul.f32 %v32, %v39
    %v42 = vsub.f32 %v24, %v40
    %v43 = vsub.f32 %v25, %v41
    %v44 = vmul.f32 %v42, %v42
    %v45 = vmul.f32 %v43, %v43
    %v46 = vsel %vm26, %v44, 0.0
    %47 = vadd.xlane.f32.xlu0 %v46
    %v48 = vpop.xlane.xlu0 %47
    %v49 = vsel %vm26, %v45, 0.0
    %50 = vadd.xlane.f32.xlu0 %v49
    %v51 = vpop.xlane.xlu0 %50
    %v52 = vmul.f32 %v48, %v39
    %v53 = vmul.f32 %v51, %v39
    %v54 = vadd.f32 %v52, 1e-05
    %v55 = vadd.f32 %v53, 1e-05
    %v56 = vrsqrt.pop %v54
    %v57 = vmul.f32 %v56, %v54
    %v58 = vmul.f32 %v57, %v56
    %v59 = vmul.f32 0.5, %v58
    %v60 = vsub.f32 1.5, %v59
    %v61 = vmul.f32 %v56, %v60
    %vm62 = vweird.f32 %v54
    %vm63 = vweird.f32 %v56
    %vm64 = vmor %vm62, %vm63
    %v65 = vsel %vm64, %v56, %v61
    %v66 = vrsqrt.pop %v55
    %v67 = vmul.f32 %v66, %v55
    %v68 = vmul.f32 %v67, %v66
    %v69 = vmul.f32 0.5, %v68
    %v70 = vsub.f32 1.5, %v69
    %v71 = vmul.f32 %v66, %v70
    %vm72 = vweird.f32 %v55
    %vm73 = vweird.f32 %v66
    %vm74 = vmor %vm72, %vm73
    %v75 = vsel %vm74, %v66, %v71
    %v76 = vmul.f32 %v42, %v65
    %v77 = vmul.f32 %v43, %v75
    %v78 = vld [vmem:[%s1] sm:$0xff]
    %v79 = vld [vmem:[%s1 + $0x8] sm:$0xff]
    %v80 = vld [vmem:[%s1 + $0x10] sm:$0xff]
    %v81 = vld [vmem:[%s1 + $0x18] sm:$0xff]
    %v82 = vld [vmem:[%s1 + $0x20] sm:$0xff]
    %v83 = vld [vmem:[%s1 + $0x28] sm:$0xff]
    %v84 = vld [vmem:[%s1 + $0x30] sm:$0xff]
    %v85 = vld [vmem:[%s1 + $0x38] sm:$0xff]
    %v86 = vld [vmem:[%s1 + $0x40] sm:$0xff]
    %v87 = vld [vmem:[%s1 + $0x48] sm:$0xff]
    %v88 = vld [vmem:[%s1 + $0x50] sm:$0xff]
    %v89 = vld [vmem:[%s1 + $0x58] sm:$0xff]
    %v90 = vld [vmem:[%s2] sm:$0x7]
    %v92 = vperm.slane %v90, 0
    %v93 = vperm.slane %v90, 1
    %v94 = vperm.slane %v90, 2
    %v99 = vsel %vm26, %v76, 0
    %v102 = vsel %vm26, %v77, 0
    %104 = vmatpush.msra.mxu0 0.0
    %105 = vmatpush.msra.mxu0 0.0
    %106 = vmatpush.msra.mxu0 0.0
    %107 = vmatpush.msra.mxu0 0.0
    %108 = vmatpush.msra.mxu0 0.0
    %109 = vmatpush.msra.mxu0 0.0
    %110 = vmatpush.msra.mxu0 0.0
    %111 = vmatpush.msra.mxu0 0.0
    %112 = vmatpush.msra.mxu0 0.0
    %113 = vmatpush.msra.mxu0 0.0
    %114 = vmatpush.msra.mxu0 0.0
    %115 = vmatpush.msra.mxu0 0.0
    %116 = vmatpush.msra.mxu0 %v87
    %117 = vmatpush.msra.mxu0 %v84
    %118 = vmatpush.msra.mxu0 %v81
    %119 = vmatpush.msra.mxu0 %v78
    %120 = vmatmul.f32.gmra.mxu0 %v99
    %v121 = vpop.f32.mrf.mxu0
    %v122 = vadd.f32 %v92, %v121
    %123 = vmatmul.f32.gmra.mxu0 %v102
    %v124 = vpop.f32.mrf.mxu0
    %v125 = vadd.f32 %v92, %v124
    %126 = vdwg.mxu0
    %127 = vmatpush.msra.mxu0 0.0
    %128 = vmatpush.msra.mxu0 0.0
    %129 = vmatpush.msra.mxu0 0.0
    %130 = vmatpush.msra.mxu0 0.0
    %131 = vmatpush.msra.mxu0 0.0
    %132 = vmatpush.msra.mxu0 0.0
    %133 = vmatpush.msra.mxu0 0.0
    %134 = vmatpush.msra.mxu0 0.0
    %135 = vmatpush.msra.mxu0 0.0
    %136 = vmatpush.msra.mxu0 0.0
    %137 = vmatpush.msra.mxu0 0.0
    %138 = vmatpush.msra.mxu0 0.0
    %139 = vmatpush.msra.mxu0 %v88
    %140 = vmatpush.msra.mxu0 %v85
    %141 = vmatpush.msra.mxu0 %v82
    %142 = vmatpush.msra.mxu0 %v79
    %143 = vmatmul.f32.gmra.mxu0 %v99
    %v144 = vpop.f32.mrf.mxu0
    %v145 = vadd.f32 %v93, %v144
    %146 = vmatmul.f32.gmra.mxu0 %v102
    %v147 = vpop.f32.mrf.mxu0
    %v148 = vadd.f32 %v93, %v147
    %149 = vdwg.mxu0
    %150 = vmatpush.msra.mxu0 0.0
    %151 = vmatpush.msra.mxu0 0.0
    %152 = vmatpush.msra.mxu0 0.0
    %153 = vmatpush.msra.mxu0 0.0
    %154 = vmatpush.msra.mxu0 0.0
    %155 = vmatpush.msra.mxu0 0.0
    %156 = vmatpush.msra.mxu0 0.0
    %157 = vmatpush.msra.mxu0 0.0
    %158 = vmatpush.msra.mxu0 0.0
    %159 = vmatpush.msra.mxu0 0.0
    %160 = vmatpush.msra.mxu0 0.0
    %161 = vmatpush.msra.mxu0 0.0
    %162 = vmatpush.msra.mxu0 %v89
    %163 = vmatpush.msra.mxu0 %v86
    %164 = vmatpush.msra.mxu0 %v83
    %165 = vmatpush.msra.mxu0 %v80
    %166 = vmatmul.f32.gmra.mxu0 %v99
    %v167 = vpop.f32.mrf.mxu0
    %v168 = vadd.f32 %v94, %v167
    %169 = vmatmul.f32.gmra.mxu0 %v102
    %v170 = vpop.f32.mrf.mxu0
    %v171 = vadd.f32 %v94, %v170
    %172 = vdwg.mxu0
    %v173 = vmul.f32 %v122, %v145
    %v174 = vmul.f32 %v125, %v148
    %v175 = vld [vmem:[%s3] sm:$0xff]
    %v176 = vld [vmem:[%s3 + $0x8] sm:$0xff]
    %v177 = vld [vmem:[%s3 + $0x10] sm:$0xff]
    %v178 = vld [vmem:[%s3 + $0x18] sm:$0xff]
    %v179 = vld [vmem:[%s3 + $0x20] sm:$0xff]
    %v180 = vld [vmem:[%s3 + $0x28] sm:$0xff]
    %v181 = vld [vmem:[%s3 + $0x30] sm:$0xff]
    %v182 = vld [vmem:[%s3 + $0x38] sm:$0xff]
    %v183 = vld [vmem:[%s3 + $0x40] sm:$0xff]
    %v184 = vld [vmem:[%s3 + $0x48] sm:$0xff]
    %v185 = vld [vmem:[%s3 + $0x50] sm:$0xff]
    %v186 = vld [vmem:[%s3 + $0x58] sm:$0xff]
    %v187 = vld [vmem:[%s3 + $0x60] sm:$0xff]
    %v188 = vld [vmem:[%s3 + $0x68] sm:$0xff]
    %v189 = vld [vmem:[%s3 + $0x70] sm:$0xff]
    %v190 = vld [vmem:[%s3 + $0x78] sm:$0xff]
    %191 = vmatpush.msra.mxu0 %v190
    %192 = vmatpush.msra.mxu0 %v189
    %193 = vmatpush.msra.mxu0 %v188
    %194 = vmatpush.msra.mxu0 %v187
    %195 = vmatpush.msra.mxu0 %v186
    %196 = vmatpush.msra.mxu0 %v185
    %197 = vmatpush.msra.mxu0 %v184
    %198 = vmatpush.msra.mxu0 %v183
    %199 = vmatpush.msra.mxu0 %v182
    %200 = vmatpush.msra.mxu0 %v181
    %201 = vmatpush.msra.mxu0 %v180
    %202 = vmatpush.msra.mxu0 %v179
    %203 = vmatpush.msra.mxu0 %v178
    %204 = vmatpush.msra.mxu0 %v177
    %205 = vmatpush.msra.mxu0 %v176
    %206 = vmatpush.msra.mxu0 %v175
    %207 = vmatmul.f32.gmra.mxu0 %v173
    %v208 = vpop.f32.mrf.mxu0
    %v209 = vadd.f32 0.0, %v208
    %210 = vmatmul.f32.gmra.mxu0 %v174
    %v211 = vpop.f32.mrf.mxu0
    %v212 = vadd.f32 0.0, %v211
    %213 = vdwg.mxu0
    %216 = vrot.lane.b32.xlu0 %v209, 96
    %v217 = vpop.permute.xlu0 %216
    %218 = vrot.lane.b32.xlu0 %v212, 96
    %v219 = vpop.permute.xlu0 %218
    %v222 = vmax.f32 %v209, %v217
    %v223 = vmax.f32 %v212, %v219
    %224 = vrot.lane.b32.xlu0 %v209, 64
    %v225 = vpop.permute.xlu0 %224
    %226 = vrot.lane.b32.xlu0 %v212, 64
    %v227 = vpop.permute.xlu0 %226
    %v230 = vmax.f32 %v222, %v225
    %v231 = vmax.f32 %v223, %v227
    %232 = vrot.lane.b32.xlu0 %v209, 32
    %v233 = vpop.permute.xlu0 %232
    %234 = vrot.lane.b32.xlu0 %v212, 32
    %v235 = vpop.permute.xlu0 %234
    %v238 = vmax.f32 %v230, %v233
    %v239 = vmax.f32 %v231, %v235
    %v240 = vsub.f32 %v209, %v238
    %v241 = vsub.f32 %v212, %v239
    %v242 = vmul.f32 %v240, 1.442695
    %v243 = vpow.pop %v242
    %v244 = vmul.f32 %v241, 1.442695
    %v245 = vpow.pop %v244
    %248 = vrot.lane.b32.xlu0 %v238, 32
    %v249 = vpop.permute.xlu0 %248
    %250 = vrot.lane.b32.xlu0 %v239, 32
    %v251 = vpop.permute.xlu0 %250
    %v254 = vsub.f32 %v209, %v249
    %v255 = vsub.f32 %v212, %v251
    %v256 = vmul.f32 %v254, 1.442695
    %v257 = vpow.pop %v256
    %v258 = vmul.f32 %v255, 1.442695
    %v259 = vpow.pop %v258
    %260 = vrot.lane.b32.xlu0 %v238, 64
    %v261 = vpop.permute.xlu0 %260
    %262 = vrot.lane.b32.xlu0 %v239, 64
    %v263 = vpop.permute.xlu0 %262
    %v266 = vsub.f32 %v209, %v261
    %v267 = vsub.f32 %v212, %v263
    %v268 = vmul.f32 %v266, 1.442695
    %v269 = vpow.pop %v268
    %v270 = vmul.f32 %v267, 1.442695
    %v271 = vpow.pop %v270
    %272 = vrot.lane.b32.xlu0 %v238, 96
    %v273 = vpop.permute.xlu0 %272
    %274 = vrot.lane.b32.xlu0 %v239, 96
    %v275 = vpop.permute.xlu0 %274
    %v278 = vsub.f32 %v209, %v273
    %v279 = vsub.f32 %v212, %v275
    %v280 = vmul.f32 %v278, 1.442695
    %v281 = vpow.pop %v280
    %v282 = vmul.f32 %v279, 1.442695
    %v283 = vpow.pop %v282
    %286 = vrot.lane.b32.xlu0 %v257, 96
    %v287 = vpop.permute.xlu0 %286
    %288 = vrot.lane.b32.xlu0 %v259, 96
    %v289 = vpop.permute.xlu0 %288
    %v292 = vadd.f32 %v243, %v287
    %v293 = vadd.f32 %v245, %v289
    %296 = vrot.lane.b32.xlu0 %v269, 64
    %v297 = vpop.permute.xlu0 %296
    %298 = vrot.lane.b32.xlu0 %v271, 64
    %v299 = vpop.permute.xlu0 %298
    %v302 = vadd.f32 %v292, %v297
    %v303 = vadd.f32 %v293, %v299
    %306 = vrot.lane.b32.xlu0 %v281, 32
    %v307 = vpop.permute.xlu0 %306
    %308 = vrot.lane.b32.xlu0 %v283, 32
    %v309 = vpop.permute.xlu0 %308
    %v312 = vadd.f32 %v302, %v307
    %v313 = vadd.f32 %v303, %v309
    %v314 = vrcp.pop %v312
    %v315 = vrcp.pop %v313
    %v316 = vmul.f32 %v312, %v314
    %v317 = vmul.f32 %v313, %v315
    %v318 = vsub.f32 2.0, %v316
    %v319 = vsub.f32 2.0, %v317
    %v320 = vmul.f32 %v314, %v318
    %v321 = vmul.f32 %v315, %v319
    %v322 = vmul.f32 %v243, %v320
    %v323 = vmul.f32 %v245, %v321
    %v324 = vmul.f32 %v322, %v168
    %v325 = vmul.f32 %v323, %v171
    %328 = vrot.lane.b32.xlu0 %v320, 32
    %v329 = vpop.permute.xlu0 %328
    %330 = vrot.lane.b32.xlu0 %v321, 32
    %v331 = vpop.permute.xlu0 %330
    %v334 = vmul.f32 %v257, %v329
    %v335 = vmul.f32 %v259, %v331
    %v336 = vmul.f32 %v334, %v168
    %v337 = vmul.f32 %v335, %v171
    %340 = vrot.lane.b32.xlu0 %v336, 96
    %v341 = vpop.permute.xlu0 %340
    %342 = vrot.lane.b32.xlu0 %v337, 96
    %v343 = vpop.permute.xlu0 %342
    %v346 = vadd.f32 %v324, %v341
    %v347 = vadd.f32 %v325, %v343
    %348 = vrot.lane.b32.xlu0 %v320, 64
    %v349 = vpop.permute.xlu0 %348
    %350 = vrot.lane.b32.xlu0 %v321, 64
    %v351 = vpop.permute.xlu0 %350
    %v354 = vmul.f32 %v269, %v349
    %v355 = vmul.f32 %v271, %v351
    %v356 = vmul.f32 %v354, %v168
    %v357 = vmul.f32 %v355, %v171
    %360 = vrot.lane.b32.xlu0 %v356, 64
    %v361 = vpop.permute.xlu0 %360
    %362 = vrot.lane.b32.xlu0 %v357, 64
    %v363 = vpop.permute.xlu0 %362
    %v366 = vadd.f32 %v346, %v361
    %v367 = vadd.f32 %v347, %v363
    %368 = vrot.lane.b32.xlu0 %v320, 96
    %v369 = vpop.permute.xlu0 %368
    %370 = vrot.lane.b32.xlu0 %v321, 96
    %v371 = vpop.permute.xlu0 %370
    %v374 = vmul.f32 %v281, %v369
    %v375 = vmul.f32 %v283, %v371
    %v376 = vmul.f32 %v374, %v168
    %v377 = vmul.f32 %v375, %v171
    %380 = vrot.lane.b32.xlu0 %v376, 32
    %v381 = vpop.permute.xlu0 %380
    %382 = vrot.lane.b32.xlu0 %v377, 32
    %v383 = vpop.permute.xlu0 %382
    %v386 = vadd.f32 %v366, %v381
    %v387 = vadd.f32 %v367, %v383
    %v388 = vld [vmem:[%s4] sm:$0xff]
    %v389 = vld [vmem:[%s4 + $0x8] sm:$0xff]
    %v390 = vld [vmem:[%s4 + $0x10] sm:$0xff]
    %v391 = vld [vmem:[%s4 + $0x18] sm:$0xff]
    %v392 = vld [vmem:[%s5] sm:$0x1]
    %v394 = vperm.slane %v392, 0
    %v397 = vsel %vm26, %v386, 0
    %v400 = vsel %vm26, %v387, 0
    %402 = vmatpush.msra.mxu0 0.0
    %403 = vmatpush.msra.mxu0 0.0
    %404 = vmatpush.msra.mxu0 0.0
    %405 = vmatpush.msra.mxu0 0.0
    %406 = vmatpush.msra.mxu0 0.0
    %407 = vmatpush.msra.mxu0 0.0
    %408 = vmatpush.msra.mxu0 0.0
    %409 = vmatpush.msra.mxu0 0.0
    %410 = vmatpush.msra.mxu0 0.0
    %411 = vmatpush.msra.mxu0 0.0
    %412 = vmatpush.msra.mxu0 0.0
    %413 = vmatpush.msra.mxu0 0.0
    %414 = vmatpush.msra.mxu0 %v391
    %415 = vmatpush.msra.mxu0 %v390
    %416 = vmatpush.msra.mxu0 %v389
    %417 = vmatpush.msra.mxu0 %v388
    %418 = vmatmul.f32.gmra.mxu0 %v397
    %v419 = vpop.f32.mrf.mxu0
    %v420 = vadd.f32 %v394, %v419
    %421 = vmatmul.f32.gmra.mxu0 %v400
    %v422 = vpop.f32.mrf.mxu0
    %v423 = vadd.f32 %v394, %v422
    %424 = vdwg.mxu0
    %425 = vst.msk [vmem:[#allocation2] sm:$0xff] %vm26, %v420
    %426 = vst.msk [vmem:[#allocation2 + $0x8] sm:$0xff] %vm26, %v423
    // Predicated region
    $region26: #{attention_forward.1} parent=1 // pred_check
      _
    $region27: #{attention_forward.1} parent=1 // pred_check_branch
      %428 = sbr.rel (0) target = $region29
    $region28: #{attention_forward.1} parent=1 // pred_region
      %430 = vsyncadd [#allocation3], 0
      %s431 = sshll.u32 [#allocation2], 4
      %s432 = int_to_ptr.vmem [resolvable:$true] %s431
      %s433 = sshll.u32 %s6, 4
      %s434 = int_to_ptr.hbm [resolvable:$true] %s433
      %439 = dma.vmem_to_hbm [thread:$0]  %s432, 256, %s434, [#allocation3], 128, 128, 8
    $region29: #{attention_forward.1} parent=1 // pred_fallthru
      _
    // Predicated region
    $region30: #{attention_forward.1} parent=1 // pred_check
      _
    $region31: #{attention_forward.1} parent=1 // pred_check_branch
      %441 = sbr.rel (0) target = $region33
    $region32: #{attention_forward.1} parent=1 // pred_region
      %443 = dma.done [#allocation3], 256
    $region33: #{attention_forward.1} parent=1 // pred_fallthru
      _
    %444 = vsyncpa [#allocation3], 1

</llo_original>
